<compile_context>
chip_gen: v6e
topology: v6e:2x2x1
jax: 0.10.0
libtpu: 0.0.40
codegen_flags: <defaults>
</compile_context>

<pallas_src>
import jax
import jax.numpy as jnp
from jax.experimental import pallas as pl
from jax.experimental.pallas import tpu as pltpu


def _value_kernel(state_ref, w1_ref, b1_ref, w2_ref, b2_ref, w3_ref, b3_ref, o_ref):
    x = state_ref[...]                                     # [TB, S]
    # fc1 + ReLU  (MXU matmul, f32 accumulation)
    h1 = jnp.dot(x, w1_ref[...], preferred_element_type=jnp.float32) + b1_ref[...]
    h1 = jnp.maximum(h1, 0.0)                              # [TB, H]
    # fc2 + ReLU
    h2 = jnp.dot(h1, w2_ref[...], preferred_element_type=jnp.float32) + b2_ref[...]
    h2 = jnp.maximum(h2, 0.0)                              # [TB, H]
    # fc3: N=1 output -> VPU multiply + lane reduce instead of an MXU matmul.
    # w3_ref is the (1, H) weight row; b3 comes in as an SMEM scalar.
    q = jnp.sum(h2 * w3_ref[...], axis=-1, keepdims=True) + b3_ref[0, 0]
    o_ref[...] = q.astype(o_ref.dtype)                     # [TB, 1]


def value_forward(state, params, *, block_b=512):
    """Pallas implementation of ValueNetwork.forward(state).

    state:  [B, S] float32
    params: (w1 [S,H], b1 [1,H], w2 [H,H], b2 [1,H], w3_row [1,H], b3 [1,1])
    returns [B, 1] float32
    """
    w1, b1, w2, b2, w3_row, b3 = params
    B, S = state.shape

    # Batch tile: full batch if small, otherwise block_b rows per grid step.
    TB = min(block_b, B)
    pad = (-B) % TB
    if pad:
        state = jnp.pad(state, ((0, pad), (0, 0)))
    Bp = B + pad
    grid = (Bp // TB,)

    # Weights/biases: full-extent blocks with a constant index map -> they are
    # DMA'd once and stay VMEM-resident across all batch-grid steps.
    resident = lambda a: pl.BlockSpec(a.shape, lambda i: (0,) * a.ndim)

    out = pl.pallas_call(
        _value_kernel,
        out_shape=jax.ShapeDtypeStruct((Bp, 1), jnp.float32),
        grid=grid,
        in_specs=[
            pl.BlockSpec((TB, S), lambda i: (i, 0)),                  # state, batch-tiled
            resident(w1), resident(b1),
            resident(w2), resident(b2),
            resident(w3_row),
            pl.BlockSpec(memory_space=pltpu.MemorySpace.SMEM),        # b3 scalar in SMEM
        ],
        out_specs=pl.BlockSpec((TB, 1), lambda i: (i, 0)),
        compiler_params=pltpu.CompilerParams(
            dimension_semantics=("parallel",)),
    )(state, w1, b1, w2, b2, w3_row, b3)

    return out[:B] if pad else out


def init_value_params(key, state_size, hidden_size, init_w=0.003):
    """Deterministic init matching the PyTorch module's __init__ semantics.

    fc1/fc2: PyTorch nn.Linear default init, U(-1/sqrt(fan_in), 1/sqrt(fan_in)).
    fc3:     weight & bias ~ U(-init_w, init_w).
    w1/w2 returned as (in_features, out_features) (PyTorch weight transposed);
    w3 returned as a (1, hidden_size) row, which IS PyTorch's fc3.weight layout.
    """
    ks = jax.random.split(key, 6)

    def uniform(k, shape, bound):
        return jax.random.uniform(k, shape, jnp.float32, -bound, bound)

    b1_bound = 1.0 / jnp.sqrt(jnp.float32(state_size))
    b2_bound = 1.0 / jnp.sqrt(jnp.float32(hidden_size))

    w1 = uniform(ks[0], (state_size, hidden_size), b1_bound)
    b1 = uniform(ks[1], (1, hidden_size), b1_bound)
    w2 = uniform(ks[2], (hidden_size, hidden_size), b2_bound)
    b2 = uniform(ks[3], (1, hidden_size), b2_bound)
    w3 = uniform(ks[4], (1, hidden_size), init_w)     # fc3.weight row
    b3 = uniform(ks[5], (1, 1), init_w)               # fc3.bias
    return (w1, b1, w2, b2, w3, b3)


def _reference_forward(state, params):
    """Pure-JAX reference for the correctness check."""
    w1, b1, w2, b2, w3_row, b3 = params
    x = jnp.maximum(state @ w1 + b1, 0.0)
    x = jnp.maximum(x @ w2 + b2, 0.0)
    return x @ w3_row.T + b3


if __name__ == "__main__":
    key = jax.random.PRNGKey(0)
    k_params, k_state = jax.random.split(key, 2)

    batch = 8
    state_size = 6
    hidden_size = 32

    params = init_value_params(k_params, state_size, hidden_size)
    state = jax.random.normal(k_state, (batch, state_size), jnp.float32)

    v = value_forward(state, params)
    v = jax.block_until_ready(v)

    v_ref = _reference_forward(state, params)
    assert v.shape == (batch, 1), v.shape
    assert jnp.allclose(v, v_ref, atol=1e-5, rtol=1e-5), (v, v_ref)

    print("KERNEL_OK")
</pallas_src>

<mosaic_0001>
module attributes {stable_mosaic.version = 11 : i64} {
  func.func @_value_kernel(%arg0: i32, %arg1: memref<8x6xf32, #tpu.memory_space<vmem>>, %arg2: memref<6x32xf32, #tpu.memory_space<vmem>>, %arg3: memref<1x32xf32, #tpu.memory_space<vmem>>, %arg4: memref<32x32xf32, #tpu.memory_space<vmem>>, %arg5: memref<1x32xf32, #tpu.memory_space<vmem>>, %arg6: memref<1x32xf32, #tpu.memory_space<vmem>>, %arg7: memref<1x1xf32, #tpu.memory_space<smem>>, %arg8: memref<8x1xf32, #tpu.memory_space<vmem>>) attributes {dimension_semantics = [#tpu.dimension_semantics<parallel>], iteration_bounds = array<i64: 1>, scalar_prefetch = 0 : i64, scratch_operands = 0 : i64, tpu.core_type = #tpu.core_type<tc>, window_params = [{transform_indices = @transform_0, window_bounds = array<i64: 8, 6>}, {pipeline_mode = #tpu.pipeline_mode<synchronous>, transform_indices = @transform_1, window_bounds = array<i64: 6, 32>}, {pipeline_mode = #tpu.pipeline_mode<synchronous>, transform_indices = @transform_2, window_bounds = array<i64: 1, 32>}, {pipeline_mode = #tpu.pipeline_mode<synchronous>, transform_indices = @transform_3, window_bounds = array<i64: 32, 32>}, {pipeline_mode = #tpu.pipeline_mode<synchronous>, transform_indices = @transform_4, window_bounds = array<i64: 1, 32>}, {pipeline_mode = #tpu.pipeline_mode<synchronous>, transform_indices = @transform_5, window_bounds = array<i64: 1, 32>}, {transform_indices = @transform_6, window_bounds = array<i64: 1, 1>}, {transform_indices = @transform_7, window_bounds = array<i64: 8, 1>}]} {
    %c0 = arith.constant 0 : index
    %c0_0 = arith.constant 0 : index
    %0 = vector.load %arg1[%c0, %c0_0] : memref<8x6xf32, #tpu.memory_space<vmem>>, vector<8x6xf32>
    %c0_1 = arith.constant 0 : index
    %c0_2 = arith.constant 0 : index
    %1 = vector.load %arg2[%c0_1, %c0_2] : memref<6x32xf32, #tpu.memory_space<vmem>>, vector<6x32xf32>
    %cst = arith.constant dense<0.000000e+00> : vector<8x32xf32>
    %2 = tpu.matmul %0, %1, %cst {dimension_numbers = #tpu.dot_dimension_numbers<[1], [0], [0], [1], [0, 0, 1, 1], [], []>} : vector<8x6xf32>, vector<6x32xf32>, vector<8x32xf32> -> vector<8x32xf32>
    %c0_3 = arith.constant 0 : index
    %c0_4 = arith.constant 0 : index
    %3 = vector.load %arg3[%c0_3, %c0_4] : memref<1x32xf32, #tpu.memory_space<vmem>>, vector<1x32xf32>
    %4 = vector.broadcast %3 : vector<1x32xf32> to vector<8x32xf32>
    %5 = arith.addf %2, %4 : vector<8x32xf32>
    %cst_5 = arith.constant 0.000000e+00 : f32
    %6 = vector.broadcast %cst_5 : f32 to vector<8x32xf32>
    %7 = arith.maximumf %5, %6 : vector<8x32xf32>
    %c0_6 = arith.constant 0 : index
    %c0_7 = arith.constant 0 : index
    %8 = vector.load %arg4[%c0_6, %c0_7] : memref<32x32xf32, #tpu.memory_space<vmem>>, vector<32x32xf32>
    %cst_8 = arith.constant dense<0.000000e+00> : vector<8x32xf32>
    %9 = tpu.matmul %7, %8, %cst_8 {dimension_numbers = #tpu.dot_dimension_numbers<[1], [0], [0], [1], [0, 0, 1, 1], [], []>} : vector<8x32xf32>, vector<32x32xf32>, vector<8x32xf32> -> vector<8x32xf32>
    %c0_9 = arith.constant 0 : index
    %c0_10 = arith.constant 0 : index
    %10 = vector.load %arg5[%c0_9, %c0_10] : memref<1x32xf32, #tpu.memory_space<vmem>>, vector<1x32xf32>
    %11 = vector.broadcast %10 : vector<1x32xf32> to vector<8x32xf32>
    %12 = arith.addf %9, %11 : vector<8x32xf32>
    %cst_11 = arith.constant 0.000000e+00 : f32
    %13 = vector.broadcast %cst_11 : f32 to vector<8x32xf32>
    %14 = arith.maximumf %12, %13 : vector<8x32xf32>
    %c0_12 = arith.constant 0 : index
    %c0_13 = arith.constant 0 : index
    %15 = vector.load %arg6[%c0_12, %c0_13] : memref<1x32xf32, #tpu.memory_space<vmem>>, vector<1x32xf32>
    %16 = vector.broadcast %15 : vector<1x32xf32> to vector<8x32xf32>
    %17 = arith.mulf %14, %16 : vector<8x32xf32>
    %cst_14 = arith.constant dense<0.000000e+00> : vector<8xf32>
    %18 = vector.multi_reduction <add>, %17, %cst_14 [1] : vector<8x32xf32> to vector<8xf32>
    %19 = vector.shape_cast %18 : vector<8xf32> to vector<8x1xf32>
    %c0_15 = arith.constant 0 : index
    %c0_16 = arith.constant 0 : index
    %20 = memref.load %arg7[%c0_15, %c0_16] : memref<1x1xf32, #tpu.memory_space<smem>>
    %21 = vector.broadcast %20 : f32 to vector<8x1xf32>
    %22 = arith.addf %19, %21 : vector<8x1xf32>
    %c0_17 = arith.constant 0 : index
    %c0_18 = arith.constant 0 : index
    %23 = vector.load %arg8[%c0_17, %c0_18] : memref<8x1xf32, #tpu.memory_space<vmem>>, vector<8x1xf32>
    tpu.vector_store %arg8[%c0_17, %c0_18], %22 {strides = array<i32>} : memref<8x1xf32, #tpu.memory_space<vmem>>, vector<8x1xf32>,
    return
  }
  func.func @transform_0(%arg0: i32) -> (i32, i32) {
    %c0_i32 = arith.constant 0 : i32
    %c0_i32_0 = arith.constant 0 : i32
    return %arg0, %c0_i32 : i32, i32
  }
  func.func @transform_1(%arg0: i32) -> (i32, i32) {
    %c0_i32 = arith.constant 0 : i32
    %c0_i32_0 = arith.constant 0 : i32
    %c0_i32_1 = arith.constant 0 : i32
    return %c0_i32, %c0_i32_0 : i32, i32
  }
  func.func @transform_2(%arg0: i32) -> (i32, i32) {
    %c0_i32 = arith.constant 0 : i32
    %c0_i32_0 = arith.constant 0 : i32
    %c0_i32_1 = arith.constant 0 : i32
    return %c0_i32, %c0_i32_0 : i32, i32
  }
  func.func @transform_3(%arg0: i32) -> (i32, i32) {
    %c0_i32 = arith.constant 0 : i32
    %c0_i32_0 = arith.constant 0 : i32
    %c0_i32_1 = arith.constant 0 : i32
    return %c0_i32, %c0_i32_0 : i32, i32
  }
  func.func @transform_4(%arg0: i32) -> (i32, i32) {
    %c0_i32 = arith.constant 0 : i32
    %c0_i32_0 = arith.constant 0 : i32
    %c0_i32_1 = arith.constant 0 : i32
    return %c0_i32, %c0_i32_0 : i32, i32
  }
  func.func @transform_5(%arg0: i32) -> (i32, i32) {
    %c0_i32 = arith.constant 0 : i32
    %c0_i32_0 = arith.constant 0 : i32
    %c0_i32_1 = arith.constant 0 : i32
    return %c0_i32, %c0_i32_0 : i32, i32
  }
  func.func @transform_6(%arg0: i32) -> (i32, i32) {
    %c0_i32 = arith.constant 0 : i32
    %c0_i32_0 = arith.constant 0 : i32
    %c0_i32_1 = arith.constant 0 : i32
    return %c0_i32, %c0_i32_0 : i32, i32
  }
  func.func @transform_7(%arg0: i32) -> (i32, i32) {
    %c0_i32 = arith.constant 0 : i32
    %c0_i32_0 = arith.constant 0 : i32
    return %arg0, %c0_i32 : i32, i32
  }
}

</mosaic_0001>

<llo_original>
// kernel: tpu_custom_call.1
$region0: #{tpu_custom_call.1}
  #allocation0 [shape = 'u32[]', space=smem, size = 0x4, offset = 0x4, fixed_abs, tag = 'smem constant byte address 0x4 - core index']
  #allocation1 [shape = 'u32[144,128]{1,0:T(1,128)}', space=vmem, size = 0x12000, scoped, tag = 'internal scratch']
  #allocation2 [shape = 'f32[1,1]{1,0:T(1,128)S(6)}', space=smem, size = 0x200, scoped, tag = 'scoped memory for tpu_custom_call.1']
  %s0 = inlined_call_operand.hbm [shape: f32[8,6], index: 0, kind: input, shape index: {}]
  %s1 = inlined_call_operand.hbm [shape: f32[6,32], index: 1, kind: input, shape index: {}]
  %s2 = inlined_call_operand.vmem [shape: f32[1,32], index: 2, kind: input, shape index: {}]
  %s3 = inlined_call_operand.hbm [shape: f32[32,32], index: 3, kind: input, shape index: {}]
  %s4 = inlined_call_operand.vmem [shape: f32[1,32], index: 4, kind: input, shape index: {}]
  %s5 = inlined_call_operand.vmem [shape: f32[1,32], index: 5, kind: input, shape index: {}]
  %s6 = inlined_call_operand.<no memory space> [shape: f32[1,1], index: 6, kind: input, shape index: {}]
  %s7 = inlined_call_operand.vmem [shape: f32[8,1], index: 7, kind: output, shape index: {}]
  %s8 = sld [smem:[#allocation0]]
  $region50: #{tpu_custom_call.1} parent=0
    _
  %s10 = ssub.s32 1, %s8
  %s11 = scalar_select 0, %s10, %s8
  %12 = sst [smem:[#allocation2]] %s6
  $region1: #{tpu_custom_call.1} parent=0
    #allocation3 [shape = 'u8[4096]{0}', space=vmem, size = 0x1000, scoped, tag = 'input window, operand 0, single buffered']
    #allocation4 [shape = 's32[1]{0}', space=sflag, size = 0x4, scoped, tag = 'scoped memory for tpu_custom_call.1']
    #allocation5 [shape = 'u8[4096]{0}', space=vmem, size = 0x1000, scoped, tag = 'input window, operand 1, single buffered']
    #allocation6 [shape = 's32[1]{0}', space=sflag, size = 0x4, scoped, tag = 'scoped memory for tpu_custom_call.1']
    #allocation7 [shape = 'u8[16384]{0}', space=vmem, size = 0x4000, scoped, tag = 'input window, operand 3, single buffered']
    %13 = vsyncpa [#allocation4], 0
    %14 = vsyncpa [#allocation6], 0
    // Predicated region
    $region2: #{tpu_custom_call.1} parent=1 // pred_check
      _
    $region3: #{tpu_custom_call.1} parent=1 // pred_check_branch
      %16 = sbr.rel (0) target = $region5
    $region4: #{tpu_custom_call.1} parent=1 // pred_region
      %s18 = ssub.s32 128, 128
      %19 = vsyncadd [#allocation4], %s18
      %s21 = sshll.u32 [#allocation3], 4
      %s22 = int_to_ptr.vmem [resolvable:$true] %s21
      %24 = dma.hbm_to_vmem [thread:$0]  %s0, 128, %s22, [#allocation4]
    $region5: #{tpu_custom_call.1} parent=1 // pred_fallthru
      _
    // Predicated region
    $region6: #{tpu_custom_call.1} parent=1 // pred_check
      _
    $region7: #{tpu_custom_call.1} parent=1 // pred_check_branch
      %26 = sbr.rel (0) target = $region9
    $region8: #{tpu_custom_call.1} parent=1 // pred_region
      %s28 = ssub.s32 128, 128
      %29 = vsyncadd [#allocation6], %s28
      %s31 = sshll.u32 [#allocation5], 4
      %s32 = int_to_ptr.vmem [resolvable:$true] %s31
      %34 = dma.hbm_to_vmem [thread:$0]  %s1, 128, %s32, [#allocation6]
    $region9: #{tpu_custom_call.1} parent=1 // pred_fallthru
      _
    // Predicated region
    $region10: #{tpu_custom_call.1} parent=1 // pred_check
      _
    $region11: #{tpu_custom_call.1} parent=1 // pred_check_branch
      %36 = sbr.rel (0) target = $region13
    $region12: #{tpu_custom_call.1} parent=1 // pred_region
      _
    $region13: #{tpu_custom_call.1} parent=1 // pred_fallthru
      _
    // Predicated region
    $region14: #{tpu_custom_call.1} parent=1 // pred_check
      _
    $region15: #{tpu_custom_call.1} parent=1 // pred_check_branch
      %38 = sbr.rel (0) target = $region17
    $region16: #{tpu_custom_call.1} parent=1 // pred_region
      %s40 = ssub.s32 512, 512
      %41 = vsyncadd [#allocation6], %s40
      %s42 = sshll.u32 [#allocation7], 4
      %s43 = int_to_ptr.vmem [resolvable:$true] %s42
      %48 = dma.hbm_to_vmem [thread:$0]  %s3, 512, %s43, [#allocation6], 128, 128, 8
    $region17: #{tpu_custom_call.1} parent=1 // pred_fallthru
      _
    // Predicated region
    $region18: #{tpu_custom_call.1} parent=1 // pred_check
      _
    $region19: #{tpu_custom_call.1} parent=1 // pred_check_branch
      %50 = sbr.rel (0) target = $region21
    $region20: #{tpu_custom_call.1} parent=1 // pred_region
      _
    $region21: #{tpu_custom_call.1} parent=1 // pred_fallthru
      _
    // Predicated region
    $region22: #{tpu_custom_call.1} parent=1 // pred_check
      _
    $region23: #{tpu_custom_call.1} parent=1 // pred_check_branch
      %52 = sbr.rel (0) target = $region25
    $region24: #{tpu_custom_call.1} parent=1 // pred_region
      _
    $region25: #{tpu_custom_call.1} parent=1 // pred_fallthru
      _
    // Predicated region
    $region26: #{tpu_custom_call.1} parent=1 // pred_check
      _
    $region27: #{tpu_custom_call.1} parent=1 // pred_check_branch
      %54 = sbr.rel (0) target = $region29
    $region28: #{tpu_custom_call.1} parent=1 // pred_region
      _
    $region29: #{tpu_custom_call.1} parent=1 // pred_fallthru
      _
    // Predicated region
    $region30: #{tpu_custom_call.1} parent=1 // pred_check
      _
    $region31: #{tpu_custom_call.1} parent=1 // pred_check_branch
      %56 = sbr.rel (0) target = $region33
    $region32: #{tpu_custom_call.1} parent=1 // pred_region
      %57 = dma.done [#allocation4], 128
    $region33: #{tpu_custom_call.1} parent=1 // pred_fallthru
      _
    // Predicated region
    $region34: #{tpu_custom_call.1} parent=1 // pred_check
      _
    $region35: #{tpu_custom_call.1} parent=1 // pred_check_branch
      %59 = sbr.rel (0) target = $region37
    $region36: #{tpu_custom_call.1} parent=1 // pred_region
      %60 = dma.done [#allocation6], 128
    $region37: #{tpu_custom_call.1} parent=1 // pred_fallthru
      _
    // Predicated region
    $region38: #{tpu_custom_call.1} parent=1 // pred_check
      _
    $region39: #{tpu_custom_call.1} parent=1 // pred_check_branch
      %62 = sbr.rel (0) target = $region41
    $region40: #{tpu_custom_call.1} parent=1 // pred_region
      %63 = dma.done [#allocation6], 512
    $region41: #{tpu_custom_call.1} parent=1 // pred_fallthru
      _
    %v64 = vld [vmem:[#allocation3] sm:$0xff]
    %v65 = vld [vmem:[#allocation5] sm:$0x3f]
    %v66 = vld [vmem:[%s2] sm:$0x1]
    %v68 = vlaneseq
    %v69 = vshrl.u32 %v68, 7
    %v70 = vsub.s32 0, %v69
    %v71 = vrot.slane %v66, %v70
    %vm73 = vcmask 48128
    %v75 = vsel %vm73, %v64, 0
    %vm77 = vcmask 1045504
    %v79 = vsel %vm77, %v65, 0
    %81 = vmatprep.subr.mxu0 0.0
    %82 = vmatpush1.msra.mxu0 0.0
    %83 = vmatprep.subr.mxu0 0.0
    %84 = vmatpush1.msra.mxu0 0.0
    %85 = vmatprep.subr.mxu0 0.0
    %86 = vmatpush1.msra.mxu0 0.0
    %87 = vmatprep.subr.mxu0 0.0
    %88 = vmatpush1.msra.mxu0 0.0
    %89 = vmatprep.subr.mxu0 0.0
    %90 = vmatpush1.msra.mxu0 0.0
    %91 = vmatprep.subr.mxu0 0.0
    %92 = vmatpush1.msra.mxu0 0.0
    %93 = vmatprep.subr.mxu0 0.0
    %94 = vmatpush1.msra.mxu0 0.0
    %95 = vmatprep.subr.mxu0 0.0
    %96 = vmatpush1.msra.mxu0 0.0
    %97 = vmatprep.subr.mxu0 0.0
    %98 = vmatpush1.msra.mxu0 0.0
    %99 = vmatprep.subr.mxu0 0.0
    %100 = vmatpush1.msra.mxu0 0.0
    %101 = vmatprep.subr.mxu0 0.0
    %102 = vmatpush1.msra.mxu0 0.0
    %103 = vmatprep.subr.mxu0 0.0
    %104 = vmatpush1.msra.mxu0 0.0
    %105 = vmatprep.subr.mxu0 0.0
    %106 = vmatpush1.msra.mxu0 0.0
    %107 = vmatprep.subr.mxu0 0.0
    %108 = vmatpush1.msra.mxu0 0.0
    %109 = vmatprep.subr.mxu0 0.0
    %110 = vmatpush1.msra.mxu0 0.0
    %111 = vmatprep.subr.mxu0 0.0
    %112 = vmatpush1.msra.mxu0 %v79
    %113 = vmatprep.subr.mxu0 0.0
    %114 = vmatpush2.msra.mxu0 0.0
    %115 = vmatprep.subr.mxu0 0.0
    %116 = vmatpush2.msra.mxu0 0.0
    %117 = vmatprep.subr.mxu0 0.0
    %118 = vmatpush2.msra.mxu0 0.0
    %119 = vmatprep.subr.mxu0 0.0
    %120 = vmatpush2.msra.mxu0 0.0
    %121 = vmatprep.subr.mxu0 0.0
    %122 = vmatpush2.msra.mxu0 0.0
    %123 = vmatprep.subr.mxu0 0.0
    %124 = vmatpush2.msra.mxu0 0.0
    %125 = vmatprep.subr.mxu0 0.0
    %126 = vmatpush2.msra.mxu0 0.0
    %127 = vmatprep.subr.mxu0 0.0
    %128 = vmatpush2.msra.mxu0 0.0
    %129 = vmatprep.subr.mxu0 0.0
    %130 = vmatpush2.msra.mxu0 0.0
    %131 = vmatprep.subr.mxu0 0.0
    %132 = vmatpush2.msra.mxu0 0.0
    %133 = vmatprep.subr.mxu0 0.0
    %134 = vmatpush2.msra.mxu0 0.0
    %135 = vmatprep.subr.mxu0 0.0
    %136 = vmatpush2.msra.mxu0 0.0
    %137 = vmatprep.subr.mxu0 0.0
    %138 = vmatpush2.msra.mxu0 0.0
    %139 = vmatprep.subr.mxu0 0.0
    %140 = vmatpush2.msra.mxu0 0.0
    %141 = vmatprep.subr.mxu0 0.0
    %142 = vmatpush2.msra.mxu0 0.0
    %143 = vmatprep.subr.mxu0 0.0
    %144 = vmatpush2.msra.mxu0 0.0
    %145 = vmatprep.mubr.f32.mxu0 0.0
    %146 = vmatmul.mubr.f32.gmra.mxu0 %v75
    %v147 = vpop.f32.mrf.mxu0
    %v148 = vadd.f32 %v71, %v147
    %v149 = vpop.f32.mrf.mxu0
    %150 = vdwg.mxu0
    %v151 = vmax.f32 %v148, 0.0
    %v152 = vld [vmem:[#allocation7] sm:$0xff]
    %v153 = vld [vmem:[#allocation7 + $0x8] sm:$0xff]
    %v154 = vld [vmem:[#allocation7 + $0x10] sm:$0xff]
    %v155 = vld [vmem:[#allocation7 + $0x18] sm:$0xff]
    %v156 = vld [vmem:[%s4] sm:$0x1]
    %v158 = vlaneseq
    %v159 = vshrl.u32 %v158, 7
    %v160 = vsub.s32 0, %v159
    %v161 = vrot.slane %v156, %v160
    %vm163 = vcmask 261120
    %v165 = vsel %vm163, %v151, 0
    %167 = vmatprep.subr.mxu0 0.0
    %168 = vmatpush1.msra.mxu0 0.0
    %169 = vmatprep.subr.mxu0 0.0
    %170 = vmatpush1.msra.mxu0 0.0
    %171 = vmatprep.subr.mxu0 0.0
    %172 = vmatpush1.msra.mxu0 0.0
    %173 = vmatprep.subr.mxu0 0.0
    %174 = vmatpush1.msra.mxu0 0.0
    %175 = vmatprep.subr.mxu0 0.0
    %176 = vmatpush1.msra.mxu0 0.0
    %177 = vmatprep.subr.mxu0 0.0
    %178 = vmatpush1.msra.mxu0 0.0
    %179 = vmatprep.subr.mxu0 0.0
    %180 = vmatpush1.msra.mxu0 0.0
    %181 = vmatprep.subr.mxu0 0.0
    %182 = vmatpush1.msra.mxu0 0.0
    %183 = vmatprep.subr.mxu0 0.0
    %184 = vmatpush1.msra.mxu0 0.0
    %185 = vmatprep.subr.mxu0 0.0
    %186 = vmatpush1.msra.mxu0 0.0
    %187 = vmatprep.subr.mxu0 0.0
    %188 = vmatpush1.msra.mxu0 0.0
    %189 = vmatprep.subr.mxu0 0.0
    %190 = vmatpush1.msra.mxu0 0.0
    %191 = vmatprep.subr.mxu0 0.0
    %192 = vmatpush1.msra.mxu0 %v155
    %193 = vmatprep.subr.mxu0 0.0
    %194 = vmatpush1.msra.mxu0 %v154
    %195 = vmatprep.subr.mxu0 0.0
    %196 = vmatpush1.msra.mxu0 %v153
    %197 = vmatprep.subr.mxu0 0.0
    %198 = vmatpush1.msra.mxu0 %v152
    %199 = vmatprep.subr.mxu0 0.0
    %200 = vmatpush2.msra.mxu0 0.0
    %201 = vmatprep.subr.mxu0 0.0
    %202 = vmatpush2.msra.mxu0 0.0
    %203 = vmatprep.subr.mxu0 0.0
    %204 = vmatpush2.msra.mxu0 0.0
    %205 = vmatprep.subr.mxu0 0.0
    %206 = vmatpush2.msra.mxu0 0.0
    %207 = vmatprep.subr.mxu0 0.0
    %208 = vmatpush2.msra.mxu0 0.0
    %209 = vmatprep.subr.mxu0 0.0
    %210 = vmatpush2.msra.mxu0 0.0
    %211 = vmatprep.subr.mxu0 0.0
    %212 = vmatpush2.msra.mxu0 0.0
    %213 = vmatprep.subr.mxu0 0.0
    %214 = vmatpush2.msra.mxu0 0.0
    %215 = vmatprep.subr.mxu0 0.0
    %216 = vmatpush2.msra.mxu0 0.0
    %217 = vmatprep.subr.mxu0 0.0
    %218 = vmatpush2.msra.mxu0 0.0
    %219 = vmatprep.subr.mxu0 0.0
    %220 = vmatpush2.msra.mxu0 0.0
    %221 = vmatprep.subr.mxu0 0.0
    %222 = vmatpush2.msra.mxu0 0.0
    %223 = vmatprep.subr.mxu0 0.0
    %224 = vmatpush2.msra.mxu0 0.0
    %225 = vmatprep.subr.mxu0 0.0
    %226 = vmatpush2.msra.mxu0 0.0
    %227 = vmatprep.subr.mxu0 0.0
    %228 = vmatpush2.msra.mxu0 0.0
    %229 = vmatprep.subr.mxu0 0.0
    %230 = vmatpush2.msra.mxu0 0.0
    %231 = vmatprep.mubr.f32.mxu0 0.0
    %232 = vmatmul.mubr.f32.gmra.mxu0 %v165
    %v233 = vpop.f32.mrf.mxu0
    %v234 = vadd.f32 %v161, %v233
    %v235 = vpop.f32.mrf.mxu0
    %236 = vdwg.mxu0
    %v237 = vmax.f32 %v234, 0.0
    %v238 = vld [vmem:[%s5] sm:$0x1]
    %v240 = vlaneseq
    %v241 = vshrl.u32 %v240, 7
    %v242 = vsub.s32 0, %v241
    %v243 = vrot.slane %v238, %v242
    %v245 = vmul.f32 %v237, %v243
    %v246 = vsel %vm163, %v245, 0.0
    %247 = vadd.xlane.f32.xlu0 %v246
    %v248 = vpop.xlane.xlu0 %247
    %s249 = sld [smem:[#allocation2]]
    %v250 = vstv %s249
    %v251 = vadd.f32 %v248, %v250
    %vm252 = vcmask 7168
    %253 = vst.msk [vmem:[%s7] sm:$0xff] %vm252, %v251
    // Predicated region
    $region42: #{tpu_custom_call.1} parent=1 // pred_check
      _
    $region43: #{tpu_custom_call.1} parent=1 // pred_check_branch
      %255 = sbr.rel (0) target = $region45
    $region44: #{tpu_custom_call.1} parent=1 // pred_region
      _
    $region45: #{tpu_custom_call.1} parent=1 // pred_fallthru
      _
    // Predicated region
    $region46: #{tpu_custom_call.1} parent=1 // pred_check
      _
    $region47: #{tpu_custom_call.1} parent=1 // pred_check_branch
      %257 = sbr.rel (0) target = $region49
    $region48: #{tpu_custom_call.1} parent=1 // pred_region
      _
    $region49: #{tpu_custom_call.1} parent=1 // pred_fallthru
      _
    %258 = vsyncpa [#allocation4], 1
    %259 = vsyncpa [#allocation6], 1

</llo_original>
